<compile_context>
chip_gen: v7x
topology: tpu7x:2x2x1
jax: 0.10.0
libtpu: 0.0.40
codegen_flags: <defaults>
</compile_context>

<pallas_src>
import jax
import jax.numpy as jnp
from jax import lax
from jax.experimental import pallas as pl
from jax.experimental.pallas import tpu as pltpu


def _round_up(x, m):
    return ((x + m - 1) // m) * m


def _device_kind():
    try:
        return jax.devices()[0].device_kind.lower()
    except Exception:
        return ""


def _make_mse_kernel(rt, lanes, nrows, q_off, num_partitions, steps, needs_mask):
    """Builds the per-partition sum-of-squared-differences kernel.

    Grid = (num_partitions [core-parallel on v7x], steps [reduction]).
    Partition p owns global row-blocks [p*q_off, ...); the last partition owns
    everything up to `nrows`. Overlap/partial blocks are masked via row ids.
    acc_ref is a single (8, lanes) f32 tile; cross-lane reduce happens once per
    partition on the last step.
    """

    def kernel(x_ref, t_ref, psum_ref, acc_ref):
        p = pl.program_id(0)
        s = pl.program_id(1)

        @pl.when(s == 0)
        def _():
            acc_ref[...] = jnp.zeros_like(acc_ref)

        d = x_ref[...].astype(jnp.float32) - t_ref[...].astype(jnp.float32)

        if needs_mask:
            # Static Python branch: only traced when some block can contain
            # rows outside this partition's valid range (partial tail block,
            # or the duplicated overlap block when nb is odd on 2 partitions).
            block_idx = p * q_off + s
            row_start = block_idx * rt
            if num_partitions == 1:
                limit = jnp.int32(nrows)
            else:
                limit = jnp.where(p == num_partitions - 1,
                                  jnp.int32(nrows),
                                  (p + 1) * q_off * rt)
            row_ids = lax.broadcasted_iota(jnp.int32, (rt, lanes), 0) + row_start
            d = jnp.where(row_ids < limit, d, 0.0)

        # (rt,128) -> (rt//8, 8, 128): tile-aligned split of the sublane axis;
        # the axis-0 sum is a VALU-only tree into a single-vreg accumulator.
        acc_ref[...] += (d * d).reshape(rt // 8, 8, lanes).sum(axis=0)

        @pl.when(s == steps - 1)
        def _():
            # Single cross-lane/sublane reduction per partition (not per step).
            psum_ref[...] = jnp.broadcast_to(jnp.sum(acc_ref[...]), psum_ref.shape)

    return kernel


def content_loss_forward(x, target, *, row_tile=None, num_partitions=None,
                         lanes=128, force_kernel=False,
                         min_kernel_elems=1 << 18):
    """Returns (input, loss) where loss = mean((x - target)**2)."""
    assert x.shape == target.shape, "input and target must match (like F.mse_loss)"
    total = int(x.size)
    assert total > 0

    # Small-input fast path: a standalone kernel launch is slower than a fused
    # jnp.mean for tiny feature maps.
    if not force_kernel and total < min_kernel_elems:
        d = x.astype(jnp.float32) - target.astype(jnp.float32)
        return x, jnp.mean(d * d)

    kind = _device_kind()
    is_v7 = "v7" in kind

    # Per-generation defaults (see review): v7x has 64 MiB VMEM/TC and 2 TCs;
    # v5e/v6e have 128 MiB VMEM and a single TC.
    if row_tile is None:
        row_tile = 8192 if is_v7 else 16384
    row_tile = _round_up(max(int(row_tile), 16), 16)

    # Lane-dense flat view. Copy-free when total % 128 == 0 (the common case);
    # otherwise pad BOTH inputs identically to lane granularity only (padded
    # diff == 0, exact).
    xf = jnp.ravel(x)
    tf = jnp.ravel(target)
    rem = total % lanes
    if rem:
        pad = lanes - rem
        xf = jnp.pad(xf, (0, pad))
        tf = jnp.pad(tf, (0, pad))
        padded_total = total + pad
    else:
        padded_total = total
    nrows = padded_total // lanes

    if num_partitions is None:
        num_partitions = 2 if (is_v7 and nrows >= 32) else 1
    num_partitions = max(1, int(num_partitions))

    # Tile height: as large as allowed, multiple of 16 (bf16-safe sublane
    # packing), never taller than the per-partition share (floor) so blocks
    # stay within the array except for the masked tail.
    rt = min(row_tile, max(16, ((nrows // num_partitions) // 16) * 16))
    nb = -(-nrows // rt)                      # total row-blocks (cdiv)
    if nb < num_partitions:
        num_partitions = 1                    # not enough blocks to split
    q_off = nb // num_partitions              # block offset of partition p
    steps = nb - (num_partitions - 1) * q_off # per-partition step count
    needs_mask = (nb * rt != nrows) or (num_partitions > 1 and steps > q_off)

    x2 = xf.reshape(nrows, lanes)
    t2 = tf.reshape(nrows, lanes)

    # 2 inputs x 2 pipeline buffers x tile + small headroom; keep <= 48 MiB so
    # we stay well under v7x's 64 MiB physical VMEM per TC.
    itemsize = jnp.dtype(x.dtype).itemsize
    buf_bytes = 2 * 2 * rt * lanes * itemsize
    vmem_limit = int(min(48 << 20, max(32 << 20, buf_bytes + (8 << 20))))

    if num_partitions > 1 and is_v7:
        # Force an actual 2-TensorCore split on v7x.
        dims = (pltpu.CORE_PARALLEL, pltpu.ARBITRARY)
    elif num_partitions > 1:
        dims = ("parallel", "arbitrary")
    else:
        dims = ("arbitrary", "arbitrary")

    kernel = _make_mse_kernel(rt, lanes, nrows, q_off, num_partitions, steps,
                              needs_mask)

    partials = pl.pallas_call(
        kernel,
        out_shape=jax.ShapeDtypeStruct((num_partitions, 1, 1), jnp.float32),
        grid_spec=pltpu.PrefetchScalarGridSpec(
            num_scalar_prefetch=0,
            grid=(num_partitions, steps),
            in_specs=[
                pl.BlockSpec((rt, lanes), lambda p, s: (p * q_off + s, 0)),
                pl.BlockSpec((rt, lanes), lambda p, s: (p * q_off + s, 0)),
            ],
            out_specs=pl.BlockSpec((1, 1, 1), lambda p, s: (p, 0, 0)),
            scratch_shapes=[pltpu.VMEM((8, lanes), jnp.float32)],
        ),
        compiler_params=pltpu.CompilerParams(
            dimension_semantics=dims,
            vmem_limit_bytes=vmem_limit,
        ),
    )(x2, t2)

    loss = jnp.sum(partials) / jnp.float32(total)

    # forward() returns the input unchanged; loss is the stored side value.
    return x, loss


if __name__ == "__main__":
    key = jax.random.PRNGKey(0)
    k_in, k_tgt = jax.random.split(key)

    # Small NCHW shape: batch=2, channels=4, spatial=16x16 (force kernel path).
    shape = (2, 4, 16, 16)
    x = jax.random.normal(k_in, shape, dtype=jnp.float32)
    target = jax.random.normal(k_tgt, shape, dtype=jnp.float32)

    out, loss = content_loss_forward(x, target, force_kernel=True)
    out = jax.block_until_ready(out)
    loss = jax.block_until_ready(loss)

    ref_loss = jnp.mean((x - target) ** 2)
    assert jnp.allclose(loss, ref_loss, rtol=1e-5, atol=1e-6), (loss, ref_loss)
    assert jnp.array_equal(out, x), "forward must return input unchanged"

    # Non-128-divisible shape: exercises the (rare) lane-granularity pad plus
    # the in-kernel row-tail mask.
    shape2 = (2, 3, 37, 53)  # 11766 elements
    x2 = jax.random.normal(k_in, shape2, dtype=jnp.float32)
    t2 = jax.random.normal(k_tgt, shape2, dtype=jnp.float32)
    out2, loss2 = content_loss_forward(x2, t2, force_kernel=True)
    loss2 = jax.block_until_ready(loss2)
    ref2 = jnp.mean((x2 - t2) ** 2)
    assert jnp.allclose(loss2, ref2, rtol=1e-5, atol=1e-6), (loss2, ref2)

    # Larger, lane-aligned shape: takes the kernel path by default with the
    # zero-copy (no pad) layout.
    shape3 = (8, 16, 64, 64)  # 524288 elements
    x3 = jax.random.normal(k_in, shape3, dtype=jnp.float32)
    t3 = jax.random.normal(k_tgt, shape3, dtype=jnp.float32)
    out3, loss3 = content_loss_forward(x3, t3)
    loss3 = jax.block_until_ready(loss3)
    ref3 = jnp.mean((x3 - t3) ** 2)
    assert jnp.allclose(loss3, ref3, rtol=1e-4, atol=1e-6), (loss3, ref3)

    print("KERNEL_OK")
</pallas_src>

<mosaic_0001>
module attributes {stable_mosaic.version = 11 : i64} {
  func.func @kernel(%arg0: i32, %arg1: i32, %arg2: memref<16x128xf32, #tpu.memory_space<vmem>>, %arg3: memref<16x128xf32, #tpu.memory_space<vmem>>, %arg4: memref<1x1x1xf32, #tpu.memory_space<vmem>>, %arg5: memref<8x128xf32, #tpu.memory_space<vmem>>) attributes {dimension_semantics = [#tpu.dimension_semantics<arbitrary>, #tpu.dimension_semantics<arbitrary>], iteration_bounds = array<i64: 1, 1>, scalar_prefetch = 0 : i64, scratch_operands = 1 : i64, tpu.core_type = #tpu.core_type<tc>, window_params = [{transform_indices = @transform_0, window_bounds = array<i64: 16, 128>}, {transform_indices = @transform_1, window_bounds = array<i64: 16, 128>}, {transform_indices = @transform_2, window_bounds = array<i64: 1, 1, 1>}]} {
    %c0_i32 = arith.constant 0 : i32
    %0 = arith.cmpi eq, %arg1, %c0_i32 : i32
    %1 = arith.extui %0 : i1 to i32
    %c0_i32_0 = arith.constant 0 : i32
    %2 = arith.cmpi ne, %1, %c0_i32_0 : i32
    scf.if %2 {
      %cst_10 = arith.constant 0.000000e+00 : f32
      %15 = vector.broadcast %cst_10 : f32 to vector<8x128xf32>
      %c0_11 = arith.constant 0 : index
      %c0_12 = arith.constant 0 : index
      %16 = vector.load %arg5[%c0_11, %c0_12] : memref<8x128xf32, #tpu.memory_space<vmem>>, vector<8x128xf32>
      tpu.vector_store %arg5[%c0_11, %c0_12], %15 {strides = array<i32>} : memref<8x128xf32, #tpu.memory_space<vmem>>, vector<8x128xf32>,
    } else {
    }
    %c0 = arith.constant 0 : index
    %c0_1 = arith.constant 0 : index
    %3 = vector.load %arg2[%c0, %c0_1] : memref<16x128xf32, #tpu.memory_space<vmem>>, vector<16x128xf32>
    %c0_2 = arith.constant 0 : index
    %c0_3 = arith.constant 0 : index
    %4 = vector.load %arg3[%c0_2, %c0_3] : memref<16x128xf32, #tpu.memory_space<vmem>>, vector<16x128xf32>
    %5 = arith.subf %3, %4 : vector<16x128xf32>
    %c0_4 = arith.constant 0 : index
    %c0_5 = arith.constant 0 : index
    %6 = vector.load %arg5[%c0_4, %c0_5] : memref<8x128xf32, #tpu.memory_space<vmem>>, vector<8x128xf32>
    %7 = arith.mulf %5, %5 : vector<16x128xf32>
    %8 = vector.shape_cast %7 : vector<16x128xf32> to vector<2x8x128xf32>
    %cst = arith.constant dense<0.000000e+00> : vector<8x128xf32>
    %9 = vector.multi_reduction <add>, %8, %cst [0] : vector<2x8x128xf32> to vector<8x128xf32>
    %10 = arith.addf %6, %9 : vector<8x128xf32>
    %c0_6 = arith.constant 0 : index
    %c0_7 = arith.constant 0 : index
    %11 = vector.load %arg5[%c0_6, %c0_7] : memref<8x128xf32, #tpu.memory_space<vmem>>, vector<8x128xf32>
    tpu.vector_store %arg5[%c0_6, %c0_7], %10 {strides = array<i32>} : memref<8x128xf32, #tpu.memory_space<vmem>>, vector<8x128xf32>,
    %c0_i32_8 = arith.constant 0 : i32
    %12 = arith.cmpi eq, %arg1, %c0_i32_8 : i32
    %13 = arith.extui %12 : i1 to i32
    %c0_i32_9 = arith.constant 0 : i32
    %14 = arith.cmpi ne, %13, %c0_i32_9 : i32
    scf.if %14 {
      %c0_10 = arith.constant 0 : index
      %c0_11 = arith.constant 0 : index
      %15 = vector.load %arg5[%c0_10, %c0_11] : memref<8x128xf32, #tpu.memory_space<vmem>>, vector<8x128xf32>
      %16 = vector.shape_cast %15 : vector<8x128xf32> to vector<1x8x128xf32>
      %cst_12 = arith.constant dense<0.000000e+00> : vector<1xf32>
      %17 = vector.multi_reduction <add>, %16, %cst_12 [1, 2] : vector<1x8x128xf32> to vector<1xf32>
      %18 = vector.shape_cast %17 : vector<1xf32> to vector<1x1x1xf32>
      %19 = vector.extract %18[0, 0, 0] : f32 from vector<1x1x1xf32>
      %20 = vector.broadcast %19 : f32 to vector<1x1x1xf32>
      %c0_13 = arith.constant 0 : index
      %c0_14 = arith.constant 0 : index
      %c0_15 = arith.constant 0 : index
      %21 = vector.load %arg4[%c0_13, %c0_14, %c0_15] : memref<1x1x1xf32, #tpu.memory_space<vmem>>, vector<1x1x1xf32>
      tpu.vector_store %arg4[%c0_13, %c0_14, %c0_15], %20 {strides = array<i32>} : memref<1x1x1xf32, #tpu.memory_space<vmem>>, vector<1x1x1xf32>,
    } else {
    }
    return
  }
  func.func @transform_0(%arg0: i32, %arg1: i32) -> (i32, i32) {
    %c1_i32 = arith.constant 1 : i32
    %0 = arith.muli %arg0, %c1_i32 : i32
    %1 = arith.addi %0, %arg1 : i32
    %c0_i32 = arith.constant 0 : i32
    %c0_i32_0 = arith.constant 0 : i32
    return %1, %c0_i32 : i32, i32
  }
  func.func @transform_1(%arg0: i32, %arg1: i32) -> (i32, i32) {
    %c1_i32 = arith.constant 1 : i32
    %0 = arith.muli %arg0, %c1_i32 : i32
    %1 = arith.addi %0, %arg1 : i32
    %c0_i32 = arith.constant 0 : i32
    %c0_i32_0 = arith.constant 0 : i32
    return %1, %c0_i32 : i32, i32
  }
  func.func @transform_2(%arg0: i32, %arg1: i32) -> (i32, i32, i32) {
    %c0_i32 = arith.constant 0 : i32
    %c0_i32_0 = arith.constant 0 : i32
    %c0_i32_1 = arith.constant 0 : i32
    return %arg0, %c0_i32, %c0_i32_0 : i32, i32, i32
  }
}

</mosaic_0001>

<llo_original>
// kernel: tpu_custom_call.1
$region0: #{tpu_custom_call.1}
  #allocation0 [shape = 'u32[]', space=smem, size = 0x4, offset = 0x4, fixed_abs, tag = 'smem constant byte address 0x4 - core index']
  #allocation1 [shape = 'u32[144,128]{1,0:T(1,128)}', space=vmem, size = 0x12000, scoped, tag = 'internal scratch']
  #allocation2 [shape = 'f32[8,128]{1,0:T(8,128)}', space=vmem, size = 0x1000, scoped, tag = 'scratch operand']
  %s0 = inlined_call_operand.hbm [shape: f32[16,128], index: 0, kind: input, shape index: {}]
  %s1 = inlined_call_operand.hbm [shape: f32[16,128], index: 1, kind: input, shape index: {}]
  %s2 = inlined_call_operand.hbm [shape: f32[1,1,1], index: 2, kind: output, shape index: {}]
  %s3 = sld [smem:[#allocation0]]
  $region34: #{tpu_custom_call.1} parent=0
    _
  %s5 = ssub.s32 1, %s3
  %s6 = scalar_select 0, %s5, %s3
  $region1: #{tpu_custom_call.1} parent=0
    #allocation3 [shape = 'u8[8192]{0}', space=vmem, size = 0x2000, scoped, tag = 'input window, operand 0, single buffered']
    #allocation4 [shape = 's32[1]{0}', space=sflag, size = 0x4, scoped, tag = 'scoped memory for tpu_custom_call.1']
    #allocation5 [shape = 's32[1]{0}', space=sflag, size = 0x4, scoped, tag = 'scoped memory for tpu_custom_call.1']
    #allocation6 [shape = 'u8[8192]{0}', space=vmem, size = 0x2000, scoped, tag = 'input window, operand 1, single buffered']
    #allocation7 [shape = 's32[1]{0}', space=sflag, size = 0x4, scoped, tag = 'scoped memory for tpu_custom_call.1']
    #allocation8 [shape = 'u8[512]{0}', space=vmem, size = 0x400, scoped, tag = 'output window, operand 0, single buffered']
    %7 = vsyncpa [#allocation4], 0
    %8 = vsyncpa [#allocation7], 0
    %9 = vsyncpa [#allocation5], 0
    // Predicated region
    $region2: #{tpu_custom_call.1} parent=1 // pred_check
      _
    $region3: #{tpu_custom_call.1} parent=1 // pred_check_branch
      %11 = sbr.rel (0) target = $region5
    $region4: #{tpu_custom_call.1} parent=1 // pred_region
      %s12 = sadd.s32 0, 0
      %s13 = smul.u32 2, %s12
      %s15 = ssub.s32 256, 256
      %16 = vsyncadd [#allocation4], %s15
      %s17 = smul.addr %s13, 128
      %s18 = scalar_lea.hbm %s0, %s17
      %s19 = sshll.u32 [#allocation3], 4
      %s20 = int_to_ptr.vmem [resolvable:$true] %s19
      %25 = dma.hbm_to_vmem [thread:$0]  %s18, 256, %s20, [#allocation4], 128, 128, 8
    $region5: #{tpu_custom_call.1} parent=1 // pred_fallthru
      _
    // Predicated region
    $region6: #{tpu_custom_call.1} parent=1 // pred_check
      _
    $region7: #{tpu_custom_call.1} parent=1 // pred_check_branch
      %27 = sbr.rel (0) target = $region9
    $region8: #{tpu_custom_call.1} parent=1 // pred_region
      %s28 = sadd.s32 0, 0
      %s29 = smul.u32 2, %s28
      %s31 = ssub.s32 256, 256
      %32 = vsyncadd [#allocation7], %s31
      %s33 = smul.addr %s29, 128
      %s34 = scalar_lea.hbm %s1, %s33
      %s35 = sshll.u32 [#allocation6], 4
      %s36 = int_to_ptr.vmem [resolvable:$true] %s35
      %41 = dma.hbm_to_vmem [thread:$0]  %s34, 256, %s36, [#allocation7], 128, 128, 8
    $region9: #{tpu_custom_call.1} parent=1 // pred_fallthru
      _
    // Predicated region
    $region10: #{tpu_custom_call.1} parent=1 // pred_check
      _
    $region11: #{tpu_custom_call.1} parent=1 // pred_check_branch
      %43 = sbr.rel (0) target = $region13
    $region12: #{tpu_custom_call.1} parent=1 // pred_region
      %44 = dma.done [#allocation4], 256
    $region13: #{tpu_custom_call.1} parent=1 // pred_fallthru
      _
    // Predicated region
    $region14: #{tpu_custom_call.1} parent=1 // pred_check
      _
    $region15: #{tpu_custom_call.1} parent=1 // pred_check_branch
      %46 = sbr.rel (0) target = $region17
    $region16: #{tpu_custom_call.1} parent=1 // pred_region
      %47 = dma.done [#allocation7], 256
    $region17: #{tpu_custom_call.1} parent=1 // pred_fallthru
      _
    %s48 = sadd.s32 0, 0
    %s49 = smul.u32 2, %s48
    %s50 = sadd.s32 0, 0
    %s51 = smul.u32 2, %s50
    %p52 = scmp.eq.s32.totalorder 0, 0
    // Predicated region
    $region18: #{tpu_custom_call.1} parent=1 // pred_check
      %p53 = pneg %p52
    $region19: #{tpu_custom_call.1} parent=1 // pred_check_branch
      %55 = sbr.rel (%p53) target = $region21
    $region20: #{tpu_custom_call.1} parent=1 // pred_region
      %56 = vst [vmem:[#allocation2] sm:$0xff] 0.0
    $region21: #{tpu_custom_call.1} parent=1 // pred_fallthru
      _
    %v57 = vld [vmem:[#allocation3] sm:$0xff]
    %v58 = vld [vmem:[#allocation3 + $0x8] sm:$0xff]
    %v59 = vld [vmem:[#allocation6] sm:$0xff]
    %v60 = vld [vmem:[#allocation6 + $0x8] sm:$0xff]
    %v61 = vsub.f32 %v57, %v59
    %v62 = vsub.f32 %v58, %v60
    %v63 = vld [vmem:[#allocation2] sm:$0xff]
    %v64 = vmul.f32 %v61, %v61
    %v65 = vmul.f32 %v62, %v62
    %v66 = vadd.f32 %v64, %v65
    %v67 = vadd.f32 %v63, %v66
    %68 = vst [vmem:[#allocation2] sm:$0xff] %v67
    // Predicated region
    $region22: #{tpu_custom_call.1} parent=1 // pred_check
      %p69 = pneg %p52
    $region23: #{tpu_custom_call.1} parent=1 // pred_check_branch
      %71 = sbr.rel (%p69) target = $region25
    $region24: #{tpu_custom_call.1} parent=1 // pred_region
      %v72 = vld [vmem:[#allocation2] sm:$0xff]
      %73 = vadd.xlane.f32.xlu0 %v72
      %v74 = vpop.xlane.xlu0 %73
      %v75 = vrot.slane %v74, 4
      %v76 = vadd.f32 %v74, %v75
      %v77 = vrot.slane %v76, 2
      %v78 = vadd.f32 %v76, %v77
      %v79 = vrot.slane %v78, 1
      %v80 = vadd.f32 %v78, %v79
      %s81 = vtos %v80
      %v82 = vstv %s81
      %vm83 = vcmask 0
      %84 = vst.msk [vmem:[#allocation8] sm:$0x1] %vm83, %v82
    $region25: #{tpu_custom_call.1} parent=1 // pred_fallthru
      _
    // Predicated region
    $region26: #{tpu_custom_call.1} parent=1 // pred_check
      _
    $region27: #{tpu_custom_call.1} parent=1 // pred_check_branch
      %86 = sbr.rel (0) target = $region29
    $region28: #{tpu_custom_call.1} parent=1 // pred_region
      %s88 = ssub.s32 16, 16
      %89 = vsyncadd [#allocation5], %s88
      %s91 = sshll.u32 [#allocation8], 4
      %s92 = int_to_ptr.vmem [resolvable:$true] %s91
      %94 = dma.vmem_to_hbm [thread:$0]  %s92, 16, %s2, [#allocation5]
    $region29: #{tpu_custom_call.1} parent=1 // pred_fallthru
      _
    // Predicated region
    $region30: #{tpu_custom_call.1} parent=1 // pred_check
      _
    $region31: #{tpu_custom_call.1} parent=1 // pred_check_branch
      %96 = sbr.rel (0) target = $region33
    $region32: #{tpu_custom_call.1} parent=1 // pred_region
      %97 = dma.done [#allocation5], 16
    $region33: #{tpu_custom_call.1} parent=1 // pred_fallthru
      _
    %98 = vsyncpa [#allocation4], 1
    %99 = vsyncpa [#allocation7], 1
    %100 = vsyncpa [#allocation5], 1

</llo_original>
